<compile_context>
chip_gen: v7x
topology: tpu7x:2x2x1
jax: 0.10.0
libtpu: 0.0.40
codegen_flags: <defaults>
</compile_context>

<pallas_src>
import jax
import jax.numpy as jnp
from jax.experimental import pallas as pl
from jax.experimental.pallas import tpu as pltpu


def _round_up(n, m):
    return ((n + m - 1) // m) * m


def _resblock_kernel(x_ref, w_ref, b_ref, o_ref):
    # One (tm, H) row tile per grid step.  W and bias are VMEM-resident.
    x = x_ref[...]                                          # (tm, H) f32 — loaded once
    y = jnp.dot(x.astype(w_ref.dtype), w_ref[...],          # bf16 operands -> MXU
                preferred_element_type=jnp.float32)         # f32 accumulation
    y = y + b_ref[...]                                      # bias broadcast (1, H), f32
    silu = y * jax.nn.sigmoid(y)                            # SiLU = y * sigmoid(y)
    o_ref[...] = (x + silu).astype(o_ref.dtype)             # residual in f32, reuse x tile


def resblock_forward(x, w_t, b, *, tm=256, compute_dtype=jnp.bfloat16):
    """y = x + SiLU(x @ w_t + b).

    x:   (..., H) float32 activations
    w_t: (H, H)   PyTorch nn.Linear weight transposed, i.e. (in, out)
    b:   (H,)     bias
    """
    orig_shape = x.shape
    H = orig_shape[-1]
    x2d = x.reshape(-1, H)
    M = x2d.shape[0]

    # Lane-dense layout: H padded to a multiple of 128; rows padded to a multiple of tm.
    H_pad = _round_up(H, 128)
    tm = min(tm, _round_up(M, 8))
    M_pad = _round_up(M, tm)
    grid_m = M_pad // tm

    x_p = jnp.pad(x2d, ((0, M_pad - M), (0, H_pad - H)))
    w_p = jnp.pad(w_t, ((0, H_pad - H), (0, H_pad - H))).astype(compute_dtype)
    b_p = jnp.pad(b, (0, H_pad - H)).reshape(1, H_pad).astype(jnp.float32)

    cost = pl.CostEstimate(
        flops=2 * M_pad * H_pad * H_pad,
        transcendentals=M_pad * H_pad,
        bytes_accessed=(x_p.size * x_p.dtype.itemsize
                        + w_p.size * w_p.dtype.itemsize
                        + b_p.size * b_p.dtype.itemsize
                        + M_pad * H_pad * x_p.dtype.itemsize),
    )

    out = pl.pallas_call(
        _resblock_kernel,
        out_shape=jax.ShapeDtypeStruct((M_pad, H_pad), x.dtype),
        grid_spec=pltpu.PrefetchScalarGridSpec(
            num_scalar_prefetch=0,
            grid=(grid_m,),
            in_specs=[
                pl.BlockSpec((tm, H_pad), lambda i: (i, 0)),      # x row tile (pipelined)
                pl.BlockSpec((H_pad, H_pad), lambda i: (0, 0)),   # W^T (bf16, VMEM-resident)
                pl.BlockSpec((1, H_pad), lambda i: (0, 0)),       # bias row (resident)
            ],
            out_specs=pl.BlockSpec((tm, H_pad), lambda i: (i, 0)),
        ),
        compiler_params=pltpu.CompilerParams(
            dimension_semantics=("parallel",),          # rows independent -> megacore on v7x
            vmem_limit_bytes=64 * 1024 * 1024,          # safe on v5e/v6e/v7x
        ),
        cost_estimate=cost,
    )(x_p, w_p, b_p)

    return out[:M, :H].reshape(orig_shape)


if __name__ == "__main__":
    batch, seq, hidden = 2, 8, 32

    key = jax.random.PRNGKey(0)
    kx, kb = jax.random.split(key)

    # Input activations.
    x = jax.random.normal(kx, (batch, seq, hidden), dtype=jnp.float32)

    # Parameters matching the module's __init__:
    #   weight <- zeros_(...)   (PyTorch (out, in); stored transposed here)
    #   bias   <- default nn.Linear init: uniform(-1/sqrt(H), 1/sqrt(H))
    w_t = jnp.zeros((hidden, hidden), dtype=jnp.float32)
    bound = 1.0 / jnp.sqrt(jnp.float32(hidden))
    b = jax.random.uniform(kb, (hidden,), minval=-bound, maxval=bound,
                           dtype=jnp.float32)

    out = resblock_forward(x, w_t, b)
    out = jax.block_until_ready(out)

    # Reference: same bf16-operand matmul with f32 accumulation as the kernel,
    # bias/SiLU/residual in f32.
    y_ref = jnp.dot(x.astype(jnp.bfloat16), w_t.astype(jnp.bfloat16),
                    preferred_element_type=jnp.float32) + b
    ref = x + y_ref * jax.nn.sigmoid(y_ref)
    assert jnp.allclose(out, ref, atol=1e-5, rtol=1e-5), "mismatch vs reference"

    print("KERNEL_OK")
</pallas_src>

<mosaic_0001>
module attributes {stable_mosaic.version = 11 : i64} {
  func.func @_resblock_kernel(%arg0: i32, %arg1: memref<16x128xf32, #tpu.memory_space<vmem>>, %arg2: memref<128x128xbf16, #tpu.memory_space<vmem>>, %arg3: memref<1x128xf32, #tpu.memory_space<vmem>>, %arg4: memref<16x128xf32, #tpu.memory_space<vmem>>) attributes {dimension_semantics = [#tpu.dimension_semantics<parallel>], iteration_bounds = array<i64: 1>, scalar_prefetch = 0 : i64, scratch_operands = 0 : i64, tpu.core_type = #tpu.core_type<tc>, window_params = [{transform_indices = @transform_0, window_bounds = array<i64: 16, 128>}, {pipeline_mode = #tpu.pipeline_mode<synchronous>, transform_indices = @transform_1, window_bounds = array<i64: 128, 128>}, {pipeline_mode = #tpu.pipeline_mode<synchronous>, transform_indices = @transform_2, window_bounds = array<i64: 1, 128>}, {transform_indices = @transform_3, window_bounds = array<i64: 16, 128>}]} {
    %c0 = arith.constant 0 : index
    %c0_0 = arith.constant 0 : index
    %0 = vector.load %arg1[%c0, %c0_0] : memref<16x128xf32, #tpu.memory_space<vmem>>, vector<16x128xf32>
    %1 = arith.truncf %0 : vector<16x128xf32> to vector<16x128xbf16>
    %c0_1 = arith.constant 0 : index
    %c0_2 = arith.constant 0 : index
    %2 = vector.load %arg2[%c0_1, %c0_2] : memref<128x128xbf16, #tpu.memory_space<vmem>>, vector<128x128xbf16>
    %cst = arith.constant dense<0.000000e+00> : vector<16x128xf32>
    %3 = tpu.matmul %1, %2, %cst {dimension_numbers = #tpu.dot_dimension_numbers<[1], [0], [0], [1], [0, 0, 1, 1], [], []>} : vector<16x128xbf16>, vector<128x128xbf16>, vector<16x128xf32> -> vector<16x128xf32>
    %c0_3 = arith.constant 0 : index
    %c0_4 = arith.constant 0 : index
    %4 = vector.load %arg3[%c0_3, %c0_4] : memref<1x128xf32, #tpu.memory_space<vmem>>, vector<1x128xf32>
    %5 = vector.broadcast %4 : vector<1x128xf32> to vector<16x128xf32>
    %6 = arith.addf %3, %5 : vector<16x128xf32>
    %7 = arith.negf %6 : vector<16x128xf32>
    %8 = math.exp %7 : vector<16x128xf32>
    %cst_5 = arith.constant 1.000000e+00 : f32
    %9 = vector.broadcast %cst_5 : f32 to vector<16x128xf32>
    %10 = arith.addf %9, %8 : vector<16x128xf32>
    %11 = arith.divf %9, %10 : vector<16x128xf32>
    %12 = arith.mulf %6, %11 : vector<16x128xf32>
    %13 = arith.addf %0, %12 : vector<16x128xf32>
    %c0_6 = arith.constant 0 : index
    %c0_7 = arith.constant 0 : index
    %14 = vector.load %arg4[%c0_6, %c0_7] : memref<16x128xf32, #tpu.memory_space<vmem>>, vector<16x128xf32>
    tpu.vector_store %arg4[%c0_6, %c0_7], %13 {strides = array<i32>} : memref<16x128xf32, #tpu.memory_space<vmem>>, vector<16x128xf32>,
    return
  }
  func.func @transform_0(%arg0: i32) -> (i32, i32) {
    %c0_i32 = arith.constant 0 : i32
    %c0_i32_0 = arith.constant 0 : i32
    return %arg0, %c0_i32 : i32, i32
  }
  func.func @transform_1(%arg0: i32) -> (i32, i32) {
    %c0_i32 = arith.constant 0 : i32
    %c0_i32_0 = arith.constant 0 : i32
    %c0_i32_1 = arith.constant 0 : i32
    return %c0_i32, %c0_i32_0 : i32, i32
  }
  func.func @transform_2(%arg0: i32) -> (i32, i32) {
    %c0_i32 = arith.constant 0 : i32
    %c0_i32_0 = arith.constant 0 : i32
    %c0_i32_1 = arith.constant 0 : i32
    return %c0_i32, %c0_i32_0 : i32, i32
  }
  func.func @transform_3(%arg0: i32) -> (i32, i32) {
    %c0_i32 = arith.constant 0 : i32
    %c0_i32_0 = arith.constant 0 : i32
    return %arg0, %c0_i32 : i32, i32
  }
}

</mosaic_0001>

<llo_original>
// kernel: tpu_custom_call.1
$region0: #{tpu_custom_call.1}
  #allocation0 [shape = 'u32[]', space=smem, size = 0x4, offset = 0x4, fixed_abs, tag = 'smem constant byte address 0x4 - core index']
  #allocation1 [shape = 'u32[144,128]{1,0:T(1,128)}', space=vmem, size = 0x12000, scoped, tag = 'internal scratch']
  %s0 = inlined_call_operand.hbm [shape: f32[16,128], index: 0, kind: input, shape index: {}]
  %s1 = inlined_call_operand.hbm [shape: bf16[128,128], index: 1, kind: input, shape index: {}]
  %s2 = inlined_call_operand.hbm [shape: f32[1,128], index: 2, kind: input, shape index: {}]
  %s3 = inlined_call_operand.hbm [shape: f32[16,128], index: 3, kind: output, shape index: {}]
  %s4 = sld [smem:[#allocation0]]
  $region34: #{tpu_custom_call.1} parent=0
    _
  %s6 = ssub.s32 1, %s4
  %s7 = scalar_select 0, %s6, %s4
  $region1: #{tpu_custom_call.1} parent=0
    #allocation2 [shape = 'u8[8192]{0}', space=vmem, size = 0x2000, scoped, tag = 'input window, operand 0, single buffered']
    #allocation3 [shape = 's32[1]{0}', space=sflag, size = 0x4, scoped, tag = 'scoped memory for tpu_custom_call.1']
    #allocation4 [shape = 's32[1]{0}', space=sflag, size = 0x4, scoped, tag = 'scoped memory for tpu_custom_call.1']
    #allocation5 [shape = 'u8[32768]{0}', space=vmem, size = 0x8000, scoped, tag = 'input window, operand 1, single buffered']
    #allocation6 [shape = 's32[1]{0}', space=sflag, size = 0x4, scoped, tag = 'scoped memory for tpu_custom_call.1']
    #allocation7 [shape = 'u8[512]{0}', space=vmem, size = 0x400, scoped, tag = 'input window, operand 2, single buffered']
    #allocation8 [shape = 'u8[8192]{0}', space=vmem, size = 0x2000, scoped, tag = 'output window, operand 0, single buffered']
    %8 = vsyncpa [#allocation3], 0
    %9 = vsyncpa [#allocation6], 0
    %10 = vsyncpa [#allocation4], 0
    // Predicated region
    $region2: #{tpu_custom_call.1} parent=1 // pred_check
      _
    $region3: #{tpu_custom_call.1} parent=1 // pred_check_branch
      %12 = sbr.rel (0) target = $region5
    $region4: #{tpu_custom_call.1} parent=1 // pred_region
      %s14 = ssub.s32 256, 256
      %15 = vsyncadd [#allocation3], %s14
      %s16 = sshll.u32 [#allocation2], 4
      %s17 = int_to_ptr.vmem [resolvable:$true] %s16
      %22 = dma.hbm_to_vmem [thread:$0]  %s0, 256, %s17, [#allocation3], 128, 128, 8
    $region5: #{tpu_custom_call.1} parent=1 // pred_fallthru
      _
    // Predicated region
    $region6: #{tpu_custom_call.1} parent=1 // pred_check
      _
    $region7: #{tpu_custom_call.1} parent=1 // pred_check_branch
      %24 = sbr.rel (0) target = $region9
    $region8: #{tpu_custom_call.1} parent=1 // pred_region
      %s26 = ssub.s32 1024, 1024
      %27 = vsyncadd [#allocation6], %s26
      %s28 = sshll.u32 [#allocation5], 4
      %s29 = int_to_ptr.vmem [resolvable:$true] %s28
      %34 = dma.hbm_to_vmem [thread:$0]  %s1, 1024, %s29, [#allocation6], 64, 64, 4
    $region9: #{tpu_custom_call.1} parent=1 // pred_fallthru
      _
    // Predicated region
    $region10: #{tpu_custom_call.1} parent=1 // pred_check
      _
    $region11: #{tpu_custom_call.1} parent=1 // pred_check_branch
      %36 = sbr.rel (0) target = $region13
    $region12: #{tpu_custom_call.1} parent=1 // pred_region
      %s38 = ssub.s32 16, 16
      %39 = vsyncadd [#allocation6], %s38
      %s41 = sshll.u32 [#allocation7], 4
      %s42 = int_to_ptr.vmem [resolvable:$true] %s41
      %44 = dma.hbm_to_vmem [thread:$0]  %s2, 16, %s42, [#allocation6]
    $region13: #{tpu_custom_call.1} parent=1 // pred_fallthru
      _
    // Predicated region
    $region14: #{tpu_custom_call.1} parent=1 // pred_check
      _
    $region15: #{tpu_custom_call.1} parent=1 // pred_check_branch
      %46 = sbr.rel (0) target = $region17
    $region16: #{tpu_custom_call.1} parent=1 // pred_region
      %47 = dma.done [#allocation3], 256
    $region17: #{tpu_custom_call.1} parent=1 // pred_fallthru
      _
    // Predicated region
    $region18: #{tpu_custom_call.1} parent=1 // pred_check
      _
    $region19: #{tpu_custom_call.1} parent=1 // pred_check_branch
      %49 = sbr.rel (0) target = $region21
    $region20: #{tpu_custom_call.1} parent=1 // pred_region
      %50 = dma.done [#allocation6], 1024
    $region21: #{tpu_custom_call.1} parent=1 // pred_fallthru
      _
    // Predicated region
    $region22: #{tpu_custom_call.1} parent=1 // pred_check
      _
    $region23: #{tpu_custom_call.1} parent=1 // pred_check_branch
      %52 = sbr.rel (0) target = $region25
    $region24: #{tpu_custom_call.1} parent=1 // pred_region
      %53 = dma.done [#allocation6], 16
    $region25: #{tpu_custom_call.1} parent=1 // pred_fallthru
      _
    %v55 = vld [vmem:[#allocation2] sm:$0xff]
    %v56 = vld [vmem:[#allocation2 + $0x8] sm:$0xff]
    %v57 = vpack.c.bf16 %v56, %v55
    %v58 = vld [vmem:[#allocation5] sm:$0xf]
    %v59 = vld [vmem:[#allocation5 + $0x4] sm:$0xf]
    %v60 = vld [vmem:[#allocation5 + $0x8] sm:$0xf]
    %v61 = vld [vmem:[#allocation5 + $0xc] sm:$0xf]
    %v62 = vld [vmem:[#allocation5 + $0x10] sm:$0xf]
    %v63 = vld [vmem:[#allocation5 + $0x14] sm:$0xf]
    %v64 = vld [vmem:[#allocation5 + $0x18] sm:$0xf]
    %v65 = vld [vmem:[#allocation5 + $0x1c] sm:$0xf]
    %v66 = vld [vmem:[#allocation5 + $0x20] sm:$0xf]
    %v67 = vld [vmem:[#allocation5 + $0x24] sm:$0xf]
    %v68 = vld [vmem:[#allocation5 + $0x28] sm:$0xf]
    %v69 = vld [vmem:[#allocation5 + $0x2c] sm:$0xf]
    %v70 = vld [vmem:[#allocation5 + $0x30] sm:$0xf]
    %v71 = vld [vmem:[#allocation5 + $0x34] sm:$0xf]
    %v72 = vld [vmem:[#allocation5 + $0x38] sm:$0xf]
    %v73 = vld [vmem:[#allocation5 + $0x3c] sm:$0xf]
    %v74 = vld [vmem:[#allocation7] sm:$0x1]
    %v76 = vlaneseq
    %v77 = vshrl.u32 %v76, 7
    %v78 = vsub.s32 0, %v77
    %v79 = vrot.slane %v74, %v78
    %v97 = vunpack.c.l.b16 %v58
    %v98 = vunpack.c.l.b16 %v59
    %v99 = vunpack.c.l.b16 %v60
    %v100 = vunpack.c.l.b16 %v61
    %v101 = vunpack.c.l.b16 %v62
    %v102 = vunpack.c.l.b16 %v63
    %v103 = vunpack.c.l.b16 %v64
    %v104 = vunpack.c.l.b16 %v65
    %v105 = vunpack.c.l.b16 %v66
    %v106 = vunpack.c.l.b16 %v67
    %v107 = vunpack.c.l.b16 %v68
    %v108 = vunpack.c.l.b16 %v69
    %v109 = vunpack.c.l.b16 %v70
    %v110 = vunpack.c.l.b16 %v71
    %v111 = vunpack.c.l.b16 %v72
    %v112 = vunpack.c.l.b16 %v73
    %v113 = vpack.c.b16 %v98, %v97
    %v114 = vpack.c.b16 %v100, %v99
    %v115 = vpack.c.b16 %v102, %v101
    %v116 = vpack.c.b16 %v104, %v103
    %v117 = vpack.c.b16 %v106, %v105
    %v118 = vpack.c.b16 %v108, %v107
    %v119 = vpack.c.b16 %v110, %v109
    %v120 = vpack.c.b16 %v112, %v111
    %129 = vmatprep.subr.bf16.mxu0 0
    %130 = vmatpush1.bf16.msra.mxu0 %v113
    %131 = vmatprep.subr.bf16.mxu0 0
    %132 = vmatpush1.bf16.msra.mxu0 %v114
    %133 = vmatprep.subr.bf16.mxu0 0
    %134 = vmatpush1.bf16.msra.mxu0 %v115
    %135 = vmatprep.subr.bf16.mxu0 0
    %136 = vmatpush1.bf16.msra.mxu0 %v116
    %137 = vmatprep.subr.bf16.mxu0 0
    %138 = vmatpush1.bf16.msra.mxu0 %v117
    %139 = vmatprep.subr.bf16.mxu0 0
    %140 = vmatpush1.bf16.msra.mxu0 %v118
    %141 = vmatprep.subr.bf16.mxu0 0
    %142 = vmatpush1.bf16.msra.mxu0 %v119
    %143 = vmatprep.subr.bf16.mxu0 0
    %144 = vmatpush1.bf16.msra.mxu0 %v120
    %145 = vmatprep.subr.bf16.mxu0 0
    %146 = vmatpush1.bf16.msra.mxu0 0
    %147 = vmatprep.subr.bf16.mxu0 0
    %148 = vmatpush1.bf16.msra.mxu0 0
    %149 = vmatprep.subr.bf16.mxu0 0
    %150 = vmatpush1.bf16.msra.mxu0 0
    %151 = vmatprep.subr.bf16.mxu0 0
    %152 = vmatpush1.bf16.msra.mxu0 0
    %153 = vmatprep.subr.bf16.mxu0 0
    %154 = vmatpush1.bf16.msra.mxu0 0
    %155 = vmatprep.subr.bf16.mxu0 0
    %156 = vmatpush1.bf16.msra.mxu0 0
    %157 = vmatprep.subr.bf16.mxu0 0
    %158 = vmatpush1.bf16.msra.mxu0 0
    %159 = vmatprep.subr.bf16.mxu0 0
    %160 = vmatpush1.bf16.msra.mxu0 0
    %161 = vmatprep.mubr.bf16.mxu0 0
    %162 = vmatmul.mubr.bf16.gmra.mrb[0].mxu0 %v57
    %v163 = vpop.f32.mrb[0].mxu0
    %v164 = vadd.f32 %v79, %v163
    %v165 = vpop.f32.mrb[0].mxu0
    %v166 = vpop.f32.mrb[0].mxu0
    %v167 = vadd.f32 %v79, %v166
    %v168 = vpop.f32.mrb[0].mxu0
    %169 = vdwg.mxu0
    %v170 = vxor.u32 %v164, 2147483648
    %v171 = vxor.u32 %v167, 2147483648
    %v172 = vmul.f32 %v170, 1.442695
    %v173 = vpow.pop %v172
    %v174 = vmul.f32 %v171, 1.442695
    %v175 = vpow.pop %v174
    %v176 = vadd.f32 %v173, 1.0
    %v177 = vadd.f32 %v175, 1.0
    %v178 = vrcp.pop %v176
    %v179 = vmul.f32 1.0, %v178
    %v180 = vrcp.pop %v177
    %v181 = vmul.f32 1.0, %v180
    %v182 = vmul.f32 %v164, %v179
    %v183 = vmul.f32 %v167, %v181
    %v184 = vadd.f32 %v55, %v182
    %v185 = vadd.f32 %v56, %v183
    %186 = vst [vmem:[#allocation8] sm:$0xff] %v184
    %187 = vst [vmem:[#allocation8 + $0x8] sm:$0xff] %v185
    // Predicated region
    $region26: #{tpu_custom_call.1} parent=1 // pred_check
      _
    $region27: #{tpu_custom_call.1} parent=1 // pred_check_branch
      %189 = sbr.rel (0) target = $region29
    $region28: #{tpu_custom_call.1} parent=1 // pred_region
      %s191 = ssub.s32 256, 256
      %192 = vsyncadd [#allocation4], %s191
      %s193 = sshll.u32 [#allocation8], 4
      %s194 = int_to_ptr.vmem [resolvable:$true] %s193
      %199 = dma.vmem_to_hbm [thread:$0]  %s194, 256, %s3, [#allocation4], 128, 128, 8
    $region29: #{tpu_custom_call.1} parent=1 // pred_fallthru
      _
    // Predicated region
    $region30: #{tpu_custom_call.1} parent=1 // pred_check
      _
    $region31: #{tpu_custom_call.1} parent=1 // pred_check_branch
      %201 = sbr.rel (0) target = $region33
    $region32: #{tpu_custom_call.1} parent=1 // pred_region
      %202 = dma.done [#allocation4], 256
    $region33: #{tpu_custom_call.1} parent=1 // pred_fallthru
      _
    %203 = vsyncpa [#allocation3], 1
    %204 = vsyncpa [#allocation6], 1
    %205 = vsyncpa [#allocation4], 1

</llo_original>
